<compile_context>
chip_gen: v5e
topology: v5e:2x2
jax: 0.10.0
libtpu: 0.0.40
codegen_flags: <defaults>
</compile_context>

<pallas_src>
import functools

import jax
import jax.numpy as jnp
from jax.experimental import pallas as pl
from jax.experimental.pallas import tpu as pltpu


def _cdiv(a, b):
    return (a + b - 1) // b


def _round_up(x, m):
    return ((x + m - 1) // m) * m


def dot_attn_kernel(h_ref, enc_ref, out_ref, *, seq_len, tile_l):
    """h_ref: (1, TB, H) f32; enc_ref: (TL, TB, H) f32; out_ref: (1, L_out, TB) f32.

    Grid = (batch tiles [parallel], L tiles [arbitrary]).  The output block is
    revisited across the L axis and doubles as the raw-score accumulator; the
    softmax is applied in place on the last L step.
    """
    j = pl.program_id(1)
    n_l = pl.num_programs(1)

    h = h_ref[0]            # (TB, H)
    enc = enc_ref[...]      # (TL, TB, H)

    # dot_score on the native (L, B, H) layout: VPU multiply + lane reduce over H.
    scores = jnp.sum(enc * h[None, :, :], axis=-1)        # (TL, TB) f32

    off = pl.multiple_of(j * tile_l, tile_l)
    out_ref[0, pl.ds(off, tile_l), :] = scores

    @pl.when(j == n_l - 1)
    def _():
        s = out_ref[0]                                     # (L_out, TB)
        # Mask padded / out-of-bounds L positions before the softmax.
        pos = jax.lax.broadcasted_iota(jnp.int32, s.shape, dimension=0)
        s = jnp.where(pos < seq_len, s, -jnp.inf)
        # Numerically stable softmax along L (axis 0), fully in f32.
        m = jnp.max(s, axis=0, keepdims=True)
        e = jnp.exp(s - m)
        denom = jnp.sum(e, axis=0, keepdims=True)
        out_ref[0] = e * pl.reciprocal(denom, approx=False)


@jax.jit
def attn_dot_forward(hidden, encoder_outputs):
    """hidden: (1, B, H) f32; encoder_outputs: (L, B, H) f32 -> attn weights (B, 1, L)."""
    _, B, H = hidden.shape
    L = encoder_outputs.shape[0]

    # Batch tile: (8, 128) rule on the second-minor dim -> full dim if B <= 8,
    # else a multiple of 8 (the partial last block is masked out by the final slice).
    TB = B if B <= 8 else 8
    nb = _cdiv(B, TB)

    # L tile: size the enc block to ~4 MiB of VMEM (double-buffered -> ~8 MiB),
    # which keeps the DMA pipeline near the HBM roofline while staying well under
    # the scoped-VMEM limit on every generation (incl. v7x's 64 MiB physical).
    row_bytes = 8 * H * 4                                  # one enc row in VMEM (sublane-padded)
    TL = max(8, ((4 * 1024 * 1024) // row_bytes) // 8 * 8)
    TL = min(TL, _round_up(L, 8))
    nl = _cdiv(L, TL)
    L_out = nl * TL

    out3 = pl.pallas_call(
        functools.partial(dot_attn_kernel, seq_len=L, tile_l=TL),
        out_shape=jax.ShapeDtypeStruct((nb, L_out, TB), jnp.float32),
        grid=(nb, nl),
        in_specs=[
            pl.BlockSpec((1, TB, H), lambda i, j: (0, i, 0)),      # hidden
            pl.BlockSpec((TL, TB, H), lambda i, j: (j, i, 0)),     # encoder_outputs
        ],
        out_specs=pl.BlockSpec((1, L_out, TB), lambda i, j: (i, 0, 0)),
        compiler_params=pltpu.CompilerParams(
            dimension_semantics=("parallel", "arbitrary"),
            vmem_limit_bytes=32 * 1024 * 1024,
        ),
    )(hidden, encoder_outputs)

    # Tiny output-only layout fixup: (nb, L_out, TB) -> (B, L) -> (B, 1, L).
    attn = jnp.transpose(out3, (0, 2, 1)).reshape(nb * TB, L_out)[:B, :L]
    return attn[:, None, :]


def reference_attn_dot(hidden, encoder_outputs):
    """Pure-JAX f32 replica of the PyTorch Attn('dot') forward."""
    energies = jnp.sum(hidden * encoder_outputs, axis=2)   # (L, B)
    attn = jax.nn.softmax(energies.T, axis=1)              # (B, L)
    return attn[:, None, :]                                # (B, 1, L)


if __name__ == "__main__":
    # Small, deterministic shapes consistent with the module (hidden_size = 768).
    B = 2      # batch
    L = 8      # encoder sequence length (tutorial MAX_LENGTH scale)
    H = 768    # hidden_size from the module spec

    key = jax.random.PRNGKey(0)
    k1, k2 = jax.random.split(key)
    hidden = jax.random.normal(k1, (1, B, H), jnp.float32) * 0.1
    encoder_outputs = jax.random.normal(k2, (L, B, H), jnp.float32) * 0.1

    out = attn_dot_forward(hidden, encoder_outputs)
    out = jax.block_until_ready(out)

    ref = reference_attn_dot(hidden, encoder_outputs)

    assert out.shape == (B, 1, L), out.shape
    # Full-f32 pipeline -> tight tolerance vs. the pure-JAX reference.
    assert jnp.allclose(out, ref, atol=1e-5, rtol=1e-4), float(jnp.max(jnp.abs(out - ref)))
    # Softmax rows sum to 1 (exact reciprocal path).
    assert jnp.allclose(jnp.sum(out, axis=2), jnp.ones((B, 1)), atol=1e-5)

    print("KERNEL_OK")
</pallas_src>

<mosaic_0001>
module attributes {stable_mosaic.version = 11 : i64} {
  func.func @dot_attn_kernel(%arg0: i32, %arg1: i32, %arg2: memref<1x2x768xf32, #tpu.memory_space<vmem>>, %arg3: memref<8x2x768xf32, #tpu.memory_space<vmem>>, %arg4: memref<1x8x2xf32, #tpu.memory_space<vmem>>) attributes {dimension_semantics = [#tpu.dimension_semantics<parallel>, #tpu.dimension_semantics<arbitrary>], iteration_bounds = array<i64: 1, 1>, scalar_prefetch = 0 : i64, scratch_operands = 0 : i64, tpu.core_type = #tpu.core_type<tc>, window_params = [{transform_indices = @transform_0, window_bounds = array<i64: 1, 2, 768>}, {transform_indices = @transform_1, window_bounds = array<i64: 8, 2, 768>}, {transform_indices = @transform_2, window_bounds = array<i64: 1, 8, 2>}]} {
    %c0 = arith.constant 0 : index
    %c0_0 = arith.constant 0 : index
    %c0_1 = arith.constant 0 : index
    %0 = vector.load %arg2[%c0, %c0_0, %c0_1] : memref<1x2x768xf32, #tpu.memory_space<vmem>>, vector<1x2x768xf32>
    %1 = vector.shape_cast %0 : vector<1x2x768xf32> to vector<2x768xf32>
    %c0_2 = arith.constant 0 : index
    %c0_3 = arith.constant 0 : index
    %c0_4 = arith.constant 0 : index
    %2 = vector.load %arg3[%c0_2, %c0_3, %c0_4] : memref<8x2x768xf32, #tpu.memory_space<vmem>>, vector<8x2x768xf32>
    %3 = vector.shape_cast %1 : vector<2x768xf32> to vector<1x2x768xf32>
    %4 = vector.broadcast %3 : vector<1x2x768xf32> to vector<8x2x768xf32>
    %5 = arith.mulf %2, %4 : vector<8x2x768xf32>
    %cst = arith.constant dense<0.000000e+00> : vector<8x2xf32>
    %6 = vector.multi_reduction <add>, %5, %cst [2] : vector<8x2x768xf32> to vector<8x2xf32>
    %c8_i32 = arith.constant 8 : i32
    %7 = arith.muli %arg1, %c8_i32 : i32
    %8 = tpu.assume_multiple %7, 8 : i32
    %c0_5 = arith.constant 0 : index
    %9 = arith.index_cast %8 : i32 to index
    %c0_6 = arith.constant 0 : index
    %10 = vector.load %arg4[%c0_5, %9, %c0_6] : memref<1x8x2xf32, #tpu.memory_space<vmem>>, vector<1x8x2xf32>
    %11 = vector.shape_cast %10 : vector<1x8x2xf32> to vector<8x2xf32>
    %12 = vector.shape_cast %6 : vector<8x2xf32> to vector<1x8x2xf32>
    tpu.vector_store %arg4[%c0_5, %9, %c0_6], %12 {strides = array<i32>} : memref<1x8x2xf32, #tpu.memory_space<vmem>>, vector<1x8x2xf32>,
    %c0_i32 = arith.constant 0 : i32
    %13 = arith.cmpi eq, %arg1, %c0_i32 : i32
    %14 = arith.extui %13 : i1 to i32
    %c0_i32_7 = arith.constant 0 : i32
    %15 = arith.cmpi ne, %14, %c0_i32_7 : i32
    scf.if %15 {
      %c0_8 = arith.constant 0 : index
      %c0_9 = arith.constant 0 : index
      %c0_10 = arith.constant 0 : index
      %16 = vector.load %arg4[%c0_8, %c0_9, %c0_10] : memref<1x8x2xf32, #tpu.memory_space<vmem>>, vector<1x8x2xf32>
      %17 = vector.shape_cast %16 : vector<1x8x2xf32> to vector<8x2xf32>
      %18 = tpu.iota {dimensions = array<i32: 0>} : vector<8x2xi32>
      %c8_i32_11 = arith.constant 8 : i32
      %19 = vector.broadcast %c8_i32_11 : i32 to vector<8x2xi32>
      %20 = arith.cmpi slt, %18, %19 : vector<8x2xi32>
      %cst_12 = arith.constant 0xFF800000 : f32
      %21 = vector.broadcast %cst_12 : f32 to vector<8x2xf32>
      %22 = arith.select %20, %17, %21 : vector<8x2xi1>, vector<8x2xf32>
      %cst_13 = arith.constant dense<0xFF800000> : vector<2xf32>
      %23 = vector.multi_reduction <maximumf>, %22, %cst_13 [0] : vector<8x2xf32> to vector<2xf32>
      %24 = vector.shape_cast %23 : vector<2xf32> to vector<1x2xf32>
      %25 = vector.broadcast %24 : vector<1x2xf32> to vector<8x2xf32>
      %26 = arith.subf %22, %25 : vector<8x2xf32>
      %27 = math.exp %26 : vector<8x2xf32>
      %cst_14 = arith.constant dense<0.000000e+00> : vector<2xf32>
      %28 = vector.multi_reduction <add>, %27, %cst_14 [0] : vector<8x2xf32> to vector<2xf32>
      %29 = vector.shape_cast %28 : vector<2xf32> to vector<1x2xf32>
      %30 = tpu.reciprocal %29 : vector<1x2xf32> -> vector<1x2xf32>
      %31 = vector.broadcast %30 : vector<1x2xf32> to vector<8x2xf32>
      %32 = arith.mulf %27, %31 : vector<8x2xf32>
      %c0_15 = arith.constant 0 : index
      %c0_16 = arith.constant 0 : index
      %c0_17 = arith.constant 0 : index
      %33 = vector.load %arg4[%c0_15, %c0_16, %c0_17] : memref<1x8x2xf32, #tpu.memory_space<vmem>>, vector<1x8x2xf32>
      %34 = vector.shape_cast %33 : vector<1x8x2xf32> to vector<8x2xf32>
      %35 = vector.shape_cast %32 : vector<8x2xf32> to vector<1x8x2xf32>
      tpu.vector_store %arg4[%c0_15, %c0_16, %c0_17], %35 {strides = array<i32>} : memref<1x8x2xf32, #tpu.memory_space<vmem>>, vector<1x8x2xf32>,
    } else {
    }
    return
  }
  func.func @transform_0(%arg0: i32, %arg1: i32) -> (i32, i32, i32) {
    %c0_i32 = arith.constant 0 : i32
    %c0_i32_0 = arith.constant 0 : i32
    %c0_i32_1 = arith.constant 0 : i32
    return %c0_i32, %arg0, %c0_i32_0 : i32, i32, i32
  }
  func.func @transform_1(%arg0: i32, %arg1: i32) -> (i32, i32, i32) {
    %c0_i32 = arith.constant 0 : i32
    %c0_i32_0 = arith.constant 0 : i32
    return %arg1, %arg0, %c0_i32 : i32, i32, i32
  }
  func.func @transform_2(%arg0: i32, %arg1: i32) -> (i32, i32, i32) {
    %c0_i32 = arith.constant 0 : i32
    %c0_i32_0 = arith.constant 0 : i32
    %c0_i32_1 = arith.constant 0 : i32
    return %arg0, %c0_i32, %c0_i32_0 : i32, i32, i32
  }
}

</mosaic_0001>

<llo_original>
// kernel: attn_dot_forward.1
$region0: #{attn_dot_forward.1}
  #allocation0 [shape = 'u32[]', space=smem, size = 0x4, offset = 0x4, fixed_abs, tag = 'smem constant byte address 0x4 - core index']
  #allocation1 [shape = 'u32[72,128]{1,0:T(1,128)}', space=vmem, size = 0x9000, scoped, tag = 'internal scratch']
  %s0 = inlined_call_operand.hbm [shape: f32[1,2,768], index: 0, kind: input, shape index: {}]
  %s1 = inlined_call_operand.hbm [shape: f32[8,2,768], index: 1, kind: input, shape index: {}]
  %s2 = inlined_call_operand.vmem [shape: f32[1,8,2], index: 2, kind: output, shape index: {}]
  %s3 = sld [smem:[#allocation0]]
  $region30: #{attn_dot_forward.1} parent=0
    _
  %s5 = ssub.s32 1, %s3
  %s6 = scalar_select 0, %s5, %s3
  $region1: #{attn_dot_forward.1} parent=0
    #allocation2 [shape = 'u8[6144]{0}', space=vmem, size = 0x1800, scoped, tag = 'input window, operand 0, single buffered']
    #allocation3 [shape = 's32[1]{0}', space=sflag, size = 0x4, scoped, tag = 'scoped memory for attn_dot_forward.1']
    #allocation4 [shape = 'u8[49152]{0}', space=vmem, size = 0xc000, scoped, tag = 'input window, operand 1, single buffered']
    #allocation5 [shape = 's32[1]{0}', space=sflag, size = 0x4, scoped, tag = 'scoped memory for attn_dot_forward.1']
    %7 = vsyncpa [#allocation3], 0
    %8 = vsyncpa [#allocation5], 0
    // Predicated region
    $region2: #{attn_dot_forward.1} parent=1 // pred_check
      _
    $region3: #{attn_dot_forward.1} parent=1 // pred_check_branch
      %10 = sbr.rel (0) target = $region5
    $region4: #{attn_dot_forward.1} parent=1 // pred_region
      %12 = vsyncadd [#allocation3], 0
      %s14 = sshll.u32 %s0, 4
      %s15 = int_to_ptr.hbm [resolvable:$true] %s14
      %s16 = sshll.u32 [#allocation2], 4
      %s17 = int_to_ptr.vmem [resolvable:$true] %s16
      %19 = dma.hbm_to_vmem [thread:$0]  %s15, 192, %s17, [#allocation3]
    $region5: #{attn_dot_forward.1} parent=1 // pred_fallthru
      _
    // Predicated region
    $region6: #{attn_dot_forward.1} parent=1 // pred_check
      _
    $region7: #{attn_dot_forward.1} parent=1 // pred_check_branch
      %21 = sbr.rel (0) target = $region9
    $region8: #{attn_dot_forward.1} parent=1 // pred_region
      %23 = vsyncadd [#allocation5], 0
      %s24 = sshll.u32 %s1, 4
      %s25 = int_to_ptr.hbm [resolvable:$true] %s24
      %s26 = sshll.u32 [#allocation4], 4
      %s27 = int_to_ptr.vmem [resolvable:$true] %s26
      %32 = dma.hbm_to_vmem [thread:$0]  %s25, 1536, %s27, [#allocation5], 192, 192, 12
    $region9: #{attn_dot_forward.1} parent=1 // pred_fallthru
      _
    // Predicated region
    $region10: #{attn_dot_forward.1} parent=1 // pred_check
      _
    $region11: #{attn_dot_forward.1} parent=1 // pred_check_branch
      %34 = sbr.rel (0) target = $region13
    $region12: #{attn_dot_forward.1} parent=1 // pred_region
      %36 = dma.done [#allocation3], 192
    $region13: #{attn_dot_forward.1} parent=1 // pred_fallthru
      _
    // Predicated region
    $region14: #{attn_dot_forward.1} parent=1 // pred_check
      _
    $region15: #{attn_dot_forward.1} parent=1 // pred_check_branch
      %38 = sbr.rel (0) target = $region17
    $region16: #{attn_dot_forward.1} parent=1 // pred_region
      %40 = dma.done [#allocation5], 1536
    $region17: #{attn_dot_forward.1} parent=1 // pred_fallthru
      _
    %v41 = vld [vmem:[#allocation2] sm:$0xff]
    %v42 = vld [vmem:[#allocation2 + $0x8] sm:$0xf]
    %v43 = vld [vmem:[#allocation4] sm:$0xff]
    %v44 = vld [vmem:[#allocation4 + $0x8] sm:$0xf]
    %v45 = vld [vmem:[#allocation4 + $0xc] sm:$0xff]
    %v46 = vld [vmem:[#allocation4 + $0x14] sm:$0xf]
    %v47 = vld [vmem:[#allocation4 + $0x18] sm:$0xff]
    %v48 = vld [vmem:[#allocation4 + $0x20] sm:$0xf]
    %v49 = vld [vmem:[#allocation4 + $0x24] sm:$0xff]
    %v50 = vld [vmem:[#allocation4 + $0x2c] sm:$0xf]
    %v51 = vld [vmem:[#allocation4 + $0x30] sm:$0xff]
    %v52 = vld [vmem:[#allocation4 + $0x38] sm:$0xf]
    %v53 = vld [vmem:[#allocation4 + $0x3c] sm:$0xff]
    %v54 = vld [vmem:[#allocation4 + $0x44] sm:$0xf]
    %v55 = vld [vmem:[#allocation4 + $0x48] sm:$0xff]
    %v56 = vld [vmem:[#allocation4 + $0x50] sm:$0xf]
    %v57 = vld [vmem:[#allocation4 + $0x54] sm:$0xff]
    %v58 = vld [vmem:[#allocation4 + $0x5c] sm:$0xf]
    %v59 = vmul.f32 %v43, %v41
    %v60 = vmul.f32 %v44, %v42
    %v61 = vmul.f32 %v45, %v41
    %v62 = vmul.f32 %v46, %v42
    %v63 = vmul.f32 %v47, %v41
    %v64 = vmul.f32 %v48, %v42
    %v65 = vmul.f32 %v49, %v41
    %v66 = vmul.f32 %v50, %v42
    %v67 = vmul.f32 %v51, %v41
    %v68 = vmul.f32 %v52, %v42
    %v69 = vmul.f32 %v53, %v41
    %v70 = vmul.f32 %v54, %v42
    %v71 = vmul.f32 %v55, %v41
    %v72 = vmul.f32 %v56, %v42
    %v73 = vmul.f32 %v57, %v41
    %v74 = vmul.f32 %v58, %v42
    %91 = vst [vmem:[#allocation1] ss:$4 sm:$0xff] %v59
    %s92 = scalar_lea.vmem [#allocation1], 32
    %93 = vst [vmem:[%s92] ss:$4 sm:$0xff] %v60
    %v94 = vld.sshfl [vmem:[#allocation1] sm:$0xff pattern:$0x73625140]
    %v95 = vld.sshfl [vmem:[#allocation1 + $0x8] sm:$0xff pattern:$0x73625140]
    %v96 = vld.sshfl [vmem:[#allocation1 + $0x10] sm:$0xff pattern:$0x73625140]
    %v97 = vld.sshfl [vmem:[#allocation1 + $0x18] sm:$0xff pattern:$0x73625140]
    %v98 = vld.sshfl [vmem:[#allocation1 + $0x20] sm:$0xff pattern:$0x73625140]
    %v99 = vld.sshfl [vmem:[#allocation1 + $0x28] sm:$0xff pattern:$0x73625140]
    %100 = vst [vmem:[#allocation1] ss:$4 sm:$0xff] %v61
    %101 = vst [vmem:[%s92] ss:$4 sm:$0xff] %v62
    %v102 = vld.sshfl [vmem:[#allocation1] sm:$0xff pattern:$0x73625140]
    %v103 = vld.sshfl [vmem:[#allocation1 + $0x8] sm:$0xff pattern:$0x73625140]
    %v104 = vld.sshfl [vmem:[#allocation1 + $0x10] sm:$0xff pattern:$0x73625140]
    %v105 = vld.sshfl [vmem:[#allocation1 + $0x18] sm:$0xff pattern:$0x73625140]
    %v106 = vld.sshfl [vmem:[#allocation1 + $0x20] sm:$0xff pattern:$0x73625140]
    %v107 = vld.sshfl [vmem:[#allocation1 + $0x28] sm:$0xff pattern:$0x73625140]
    %108 = vst [vmem:[#allocation1] ss:$4 sm:$0xff] %v63
    %109 = vst [vmem:[%s92] ss:$4 sm:$0xff] %v64
    %v110 = vld.sshfl [vmem:[#allocation1] sm:$0xff pattern:$0x73625140]
    %v111 = vld.sshfl [vmem:[#allocation1 + $0x8] sm:$0xff pattern:$0x73625140]
    %v112 = vld.sshfl [vmem:[#allocation1 + $0x10] sm:$0xff pattern:$0x73625140]
    %v113 = vld.sshfl [vmem:[#allocation1 + $0x18] sm:$0xff pattern:$0x73625140]
    %v114 = vld.sshfl [vmem:[#allocation1 + $0x20] sm:$0xff pattern:$0x73625140]
    %v115 = vld.sshfl [vmem:[#allocation1 + $0x28] sm:$0xff pattern:$0x73625140]
    %116 = vst [vmem:[#allocation1] ss:$4 sm:$0xff] %v65
    %117 = vst [vmem:[%s92] ss:$4 sm:$0xff] %v66
    %v118 = vld.sshfl [vmem:[#allocation1] sm:$0xff pattern:$0x73625140]
    %v119 = vld.sshfl [vmem:[#allocation1 + $0x8] sm:$0xff pattern:$0x73625140]
    %v120 = vld.sshfl [vmem:[#allocation1 + $0x10] sm:$0xff pattern:$0x73625140]
    %v121 = vld.sshfl [vmem:[#allocation1 + $0x18] sm:$0xff pattern:$0x73625140]
    %v122 = vld.sshfl [vmem:[#allocation1 + $0x20] sm:$0xff pattern:$0x73625140]
    %v123 = vld.sshfl [vmem:[#allocation1 + $0x28] sm:$0xff pattern:$0x73625140]
    %124 = vst [vmem:[#allocation1] ss:$4 sm:$0xff] %v67
    %125 = vst [vmem:[%s92] ss:$4 sm:$0xff] %v68
    %v126 = vld.sshfl [vmem:[#allocation1] sm:$0xff pattern:$0x73625140]
    %v127 = vld.sshfl [vmem:[#allocation1 + $0x8] sm:$0xff pattern:$0x73625140]
    %v128 = vld.sshfl [vmem:[#allocation1 + $0x10] sm:$0xff pattern:$0x73625140]
    %v129 = vld.sshfl [vmem:[#allocation1 + $0x18] sm:$0xff pattern:$0x73625140]
    %v130 = vld.sshfl [vmem:[#allocation1 + $0x20] sm:$0xff pattern:$0x73625140]
    %v131 = vld.sshfl [vmem:[#allocation1 + $0x28] sm:$0xff pattern:$0x73625140]
    %132 = vst [vmem:[#allocation1] ss:$4 sm:$0xff] %v69
    %133 = vst [vmem:[%s92] ss:$4 sm:$0xff] %v70
    %v134 = vld.sshfl [vmem:[#allocation1] sm:$0xff pattern:$0x73625140]
    %v135 = vld.sshfl [vmem:[#allocation1 + $0x8] sm:$0xff pattern:$0x73625140]
    %v136 = vld.sshfl [vmem:[#allocation1 + $0x10] sm:$0xff pattern:$0x73625140]
    %v137 = vld.sshfl [vmem:[#allocation1 + $0x18] sm:$0xff pattern:$0x73625140]
    %v138 = vld.sshfl [vmem:[#allocation1 + $0x20] sm:$0xff pattern:$0x73625140]
    %v139 = vld.sshfl [vmem:[#allocation1 + $0x28] sm:$0xff pattern:$0x73625140]
    %140 = vst [vmem:[#allocation1] ss:$4 sm:$0xff] %v71
    %141 = vst [vmem:[%s92] ss:$4 sm:$0xff] %v72
    %v142 = vld.sshfl [vmem:[#allocation1] sm:$0xff pattern:$0x73625140]
    %v143 = vld.sshfl [vmem:[#allocation1 + $0x8] sm:$0xff pattern:$0x73625140]
    %v144 = vld.sshfl [vmem:[#allocation1 + $0x10] sm:$0xff pattern:$0x73625140]
    %v145 = vld.sshfl [vmem:[#allocation1 + $0x18] sm:$0xff pattern:$0x73625140]
    %v146 = vld.sshfl [vmem:[#allocation1 + $0x20] sm:$0xff pattern:$0x73625140]
    %v147 = vld.sshfl [vmem:[#allocation1 + $0x28] sm:$0xff pattern:$0x73625140]
    %148 = vst [vmem:[#allocation1] ss:$4 sm:$0xff] %v73
    %149 = vst [vmem:[%s92] ss:$4 sm:$0xff] %v74
    %v150 = vld.sshfl [vmem:[#allocation1] sm:$0xff pattern:$0x73625140]
    %v151 = vld.sshfl [vmem:[#allocation1 + $0x8] sm:$0xff pattern:$0x73625140]
    %v152 = vld.sshfl [vmem:[#allocation1 + $0x10] sm:$0xff pattern:$0x73625140]
    %v153 = vld.sshfl [vmem:[#allocation1 + $0x18] sm:$0xff pattern:$0x73625140]
    %v154 = vld.sshfl [vmem:[#allocation1 + $0x20] sm:$0xff pattern:$0x73625140]
    %v155 = vld.sshfl [vmem:[#allocation1 + $0x28] sm:$0xff pattern:$0x73625140]
    %vm204 = vcmask 1041408
    %v205 = vsel %vm204, %v94, 0.0
    %v206 = vsel %vm204, %v95, 0.0
    %v207 = vadd.f32 %v205, %v206
    %v208 = vsel %vm204, %v96, 0.0
    %v209 = vadd.f32 %v207, %v208
    %v210 = vsel %vm204, %v97, 0.0
    %v211 = vadd.f32 %v209, %v210
    %v212 = vsel %vm204, %v98, 0.0
    %v213 = vadd.f32 %v211, %v212
    %v214 = vsel %vm204, %v99, 0.0
    %v215 = vadd.f32 %v213, %v214
    %216 = vadd.xlane.f32.xlu0 %v215
    %v217 = vpop.xlane.xlu0 %216
    %v218 = vsel %vm204, %v102, 0.0
    %v219 = vsel %vm204, %v103, 0.0
    %v220 = vadd.f32 %v218, %v219
    %v221 = vsel %vm204, %v104, 0.0
    %v222 = vadd.f32 %v220, %v221
    %v223 = vsel %vm204, %v105, 0.0
    %v224 = vadd.f32 %v222, %v223
    %v225 = vsel %vm204, %v106, 0.0
    %v226 = vadd.f32 %v224, %v225
    %v227 = vsel %vm204, %v107, 0.0
    %v228 = vadd.f32 %v226, %v227
    %229 = vadd.xlane.f32.xlu0 %v228
    %v230 = vpop.xlane.xlu0 %229
    %v231 = vsel %vm204, %v110, 0.0
    %v232 = vsel %vm204, %v111, 0.0
    %v233 = vadd.f32 %v231, %v232
    %v234 = vsel %vm204, %v112, 0.0
    %v235 = vadd.f32 %v233, %v234
    %v236 = vsel %vm204, %v113, 0.0
    %v237 = vadd.f32 %v235, %v236
    %v238 = vsel %vm204, %v114, 0.0
    %v239 = vadd.f32 %v237, %v238
    %v240 = vsel %vm204, %v115, 0.0
    %v241 = vadd.f32 %v239, %v240
    %242 = vadd.xlane.f32.xlu0 %v241
    %v243 = vpop.xlane.xlu0 %242
    %v244 = vsel %vm204, %v118, 0.0
    %v245 = vsel %vm204, %v119, 0.0
    %v246 = vadd.f32 %v244, %v245
    %v247 = vsel %vm204, %v120, 0.0
    %v248 = vadd.f32 %v246, %v247
    %v249 = vsel %vm204, %v121, 0.0
    %v250 = vadd.f32 %v248, %v249
    %v251 = vsel %vm204, %v122, 0.0
    %v252 = vadd.f32 %v250, %v251
    %v253 = vsel %vm204, %v123, 0.0
    %v254 = vadd.f32 %v252, %v253
    %255 = vadd.xlane.f32.xlu0 %v254
    %v256 = vpop.xlane.xlu0 %255
    %v257 = vsel %vm204, %v126, 0.0
    %v258 = vsel %vm204, %v127, 0.0
    %v259 = vadd.f32 %v257, %v258
    %v260 = vsel %vm204, %v128, 0.0
    %v261 = vadd.f32 %v259, %v260
    %v262 = vsel %vm204, %v129, 0.0
    %v263 = vadd.f32 %v261, %v262
    %v264 = vsel %vm204, %v130, 0.0
    %v265 = vadd.f32 %v263, %v264
    %v266 = vsel %vm204, %v131, 0.0
    %v267 = vadd.f32 %v265, %v266
    %268 = vadd.xlane.f32.xlu0 %v267
    %v269 = vpop.xlane.xlu0 %268
    %v270 = vsel %vm204, %v134, 0.0
    %v271 = vsel %vm204, %v135, 0.0
    %v272 = vadd.f32 %v270, %v271
    %v273 = vsel %vm204, %v136, 0.0
    %v274 = vadd.f32 %v272, %v273
    %v275 = vsel %vm204, %v137, 0.0
    %v276 = vadd.f32 %v274, %v275
    %v277 = vsel %vm204, %v138, 0.0
    %v278 = vadd.f32 %v276, %v277
    %v279 = vsel %vm204, %v139, 0.0
    %v280 = vadd.f32 %v278, %v279
    %281 = vadd.xlane.f32.xlu0 %v280
    %v282 = vpop.xlane.xlu0 %281
    %v283 = vsel %vm204, %v142, 0.0
    %v284 = vsel %vm204, %v143, 0.0
    %v285 = vadd.f32 %v283, %v284
    %v286 = vsel %vm204, %v144, 0.0
    %v287 = vadd.f32 %v285, %v286
    %v288 = vsel %vm204, %v145, 0.0
    %v289 = vadd.f32 %v287, %v288
    %v290 = vsel %vm204, %v146, 0.0
    %v291 = vadd.f32 %v289, %v290
    %v292 = vsel %vm204, %v147, 0.0
    %v293 = vadd.f32 %v291, %v292
    %294 = vadd.xlane.f32.xlu0 %v293
    %v295 = vpop.xlane.xlu0 %294
    %v296 = vsel %vm204, %v150, 0.0
    %v297 = vsel %vm204, %v151, 0.0
    %v298 = vadd.f32 %v296, %v297
    %v299 = vsel %vm204, %v152, 0.0
    %v300 = vadd.f32 %v298, %v299
    %v301 = vsel %vm204, %v153, 0.0
    %v302 = vadd.f32 %v300, %v301
    %v303 = vsel %vm204, %v154, 0.0
    %v304 = vadd.f32 %v302, %v303
    %v305 = vsel %vm204, %v155, 0.0
    %v306 = vadd.f32 %v304, %v305
    %307 = vadd.xlane.f32.xlu0 %v306
    %v308 = vpop.xlane.xlu0 %307
    %s309 = smul.u32 0, 8
    %v318 = vlaneseq
    %v319 = vand.u32 %v318, 127
    %v320 = vperm.slane %v217, %v319
    %v321 = vperm.slane %v230, %v319
    %v322 = vperm.slane %v243, %v319
    %v323 = vperm.slane %v256, %v319
    %v324 = vperm.slane %v269, %v319
    %v325 = vperm.slane %v282, %v319
    %v326 = vperm.slane %v295, %v319
    %v327 = vperm.slane %v308, %v319
    %vm328 = vcmask 1041409
    %v329 = vsel %vm328, %v321, %v320
    %vm330 = vcmask 1042434
    %v331 = vsel %vm330, %v322, %v329
    %vm332 = vcmask 1043459
    %v333 = vsel %vm332, %v323, %v331
    %vm334 = vcmask 1044484
    %v335 = vsel %vm334, %v324, %v333
    %vm336 = vcmask 1045509
    %v337 = vsel %vm336, %v325, %v335
    %vm338 = vcmask 1046534
    %v339 = vsel %vm338, %v326, %v337
    %vm340 = vcmask 1047559
    %v341 = vsel %vm340, %v327, %v339
    %s343 = scalar_lea.vmem %s2, %s309
    %vm344 = vcmask 15360
    %345 = vst.msk [vmem:[%s343] sm:$0xff] %vm344, %v341
    %p346 = scmp.eq.s32.totalorder 0, 0
    // Predicated region
    $region18: #{attn_dot_forward.1} parent=1 // pred_check
      %p347 = pneg %p346
    $region19: #{attn_dot_forward.1} parent=1 // pred_check_branch
      %349 = sbr.rel (%p347) target = $region21
    $region20: #{attn_dot_forward.1} parent=1 // pred_region
      %v350 = vld [vmem:[%s2] sm:$0xff]
      %v351 = vlaneseq
      %v352 = vshrl.u32 %v351, 7
      %vm353 = vcmp.lt.s32.totalorder %v352, 8
      %v354 = vsel %vm353, %v350, -inf
      %v355 = vsel %vm344, %v354, -inf
      %v356 = vrot.slane %v355, 4
      %v357 = vmax.f32 %v355, %v356
      %v358 = vrot.slane %v357, 2
      %v359 = vmax.f32 %v357, %v358
      %v360 = vrot.slane %v359, 1
      %v361 = vmax.f32 %v359, %v360
      %v362 = vsub.f32 %v354, %v361
      %v363 = vmul.f32 %v362, 1.442695
      %v364 = vpow.pop %v363
      %v365 = vsel %vm344, %v364, 0.0
      %v366 = vrot.slane %v365, 4
      %v367 = vadd.f32 %v365, %v366
      %v368 = vrot.slane %v367, 2
      %v369 = vadd.f32 %v367, %v368
      %v370 = vrot.slane %v369, 1
      %v371 = vadd.f32 %v369, %v370
      %v372 = vrcp.pop %v371
      %v373 = vmul.f32 %v371, %v372
      %v374 = vsub.f32 1.0, %v373
      %v375 = vmul.f32 %v372, %v374
      %v376 = vadd.f32 %v372, %v375
      %vm377 = vweird.f32 %v371
      %vm378 = vweird.f32 %v372
      %vm379 = vmor %vm377, %vm378
      %v380 = vsel %vm379, %v372, %v376
      %v381 = vand.u32 2147483647, %v371
      %vm382 = vcmp.eq.f32.partialorder %v381, 8.507059e+37
      %v383 = vand.u32 %v371, 2147483648
      %v384 = vor.u32 1.1754944e-38, %v383
      %v385 = vsel %vm382, %v384, %v380
      %v386 = vmul.f32 %v364, %v385
      %387 = vst.msk [vmem:[%s2] sm:$0xff] %vm344, %v386
    $region21: #{attn_dot_forward.1} parent=1 // pred_fallthru
      _
    // Predicated region
    $region22: #{attn_dot_forward.1} parent=1 // pred_check
      _
    $region23: #{attn_dot_forward.1} parent=1 // pred_check_branch
      %389 = sbr.rel (0) target = $region25
    $region24: #{attn_dot_forward.1} parent=1 // pred_region
      _
    $region25: #{attn_dot_forward.1} parent=1 // pred_fallthru
      _
    // Predicated region
    $region26: #{attn_dot_forward.1} parent=1 // pred_check
      _
    $region27: #{attn_dot_forward.1} parent=1 // pred_check_branch
      %391 = sbr.rel (0) target = $region29
    $region28: #{attn_dot_forward.1} parent=1 // pred_region
      _
    $region29: #{attn_dot_forward.1} parent=1 // pred_fallthru
      _
    %392 = vsyncpa [#allocation3], 1
    %393 = vsyncpa [#allocation5], 1

</llo_original>
